<compile_context>
chip_gen: v7x
topology: tpu7x:2x2x1
jax: 0.10.0
libtpu: 0.0.40
codegen_flags: <defaults>
</compile_context>

<pallas_src>
import jax
import jax.numpy as jnp
from jax.experimental import pallas as pl
from jax.experimental.pallas import tpu as pltpu

LANE = 128
SUBLANE = 8
MAX_TILE_R = 1024  # 1024x128 f32 = 512 KiB/tile; (E+1) inputs double-buffered
                   # stays well under the scoped-VMEM limit on v5e/v6e/v7x.


def _as_lane_rows(x):
    """Flatten to a (rows, 128) lane-aligned view. Pads only when numel is not
    a multiple of 128 (needed for the reshape); the ragged row tail is handled
    by in-kernel masking rather than padding in HBM."""
    flat = x.reshape(-1)
    n = flat.shape[0]
    rem = n % LANE
    if rem != 0:
        flat = jnp.pad(flat, (0, LANE - rem))
    return flat.reshape(-1, LANE)


def _round_up(x, m):
    return ((x + m - 1) // m) * m


def deep_supervision_l1(srs, hr, size_average=True, reduce=True):
    """Pallas equivalent of DeepSupervisionL1.forward.

    Returns [total_loss / len(srs), loss_exit_0, ..., loss_exit_{E-1}] where
    each loss is mean |sr - hr| (F.l1_loss default 'mean' reduction).
    """
    # TODO(synk): only the default mean reduction (size_average=True,
    # reduce=True) is implemented, matching the module's default construction.
    assert size_average and reduce

    n_exits = len(srs)
    numel = hr.size
    itemsize = jnp.dtype(hr.dtype).itemsize

    hr2d = _as_lane_rows(hr)
    sr2ds = [_as_lane_rows(sr) for sr in srs]
    rows = hr2d.shape[0]

    tile_r = min(MAX_TILE_R, _round_up(rows, SUBLANE))
    num_tiles = pl.cdiv(rows, tile_r)
    # True when the grid's last tile hangs past the valid data (ragged rows
    # and/or the lane pad) -> mask inside the kernel.
    need_mask = (num_tiles * tile_r * LANE) != numel

    def kernel(hr_ref, *args):
        sr_refs = args[:n_exits]
        out_ref = args[n_exits]
        t = pl.program_id(0)

        @pl.when(t == 0)
        def _init():
            for e in range(n_exits):
                out_ref[e] = jnp.float32(0.0)

        hr_tile = hr_ref[...]  # (tile_r, 128), read once, reused for all exits

        if need_mask:
            row = jax.lax.broadcasted_iota(jnp.int32, (tile_r, LANE), 0)
            lane = jax.lax.broadcasted_iota(jnp.int32, (tile_r, LANE), 1)
            flat_idx = (t * tile_r + row) * LANE + lane
            valid = flat_idx < numel

        for e in range(n_exits):
            # Subtract/abs in the input dtype (bf16 stays bf16 -> half the
            # vld traffic), accumulate the reduction in f32.
            d = jnp.abs(sr_refs[e][...] - hr_tile)
            if need_mask:
                d = jnp.where(valid, d, jnp.zeros_like(d))
            out_ref[e] = out_ref[e] + jnp.sum(d.astype(jnp.float32))

    tile_spec = pl.BlockSpec((tile_r, LANE), lambda t: (t, 0))

    # TODO(synk): on v7x, a leading size-2 "parallel" grid axis with per-core
    # (2, E) partial sums would split the row loop across both TensorCores for
    # up to ~2x; kept single-axis here for portability/robustness.
    sums = pl.pallas_call(
        kernel,
        out_shape=jax.ShapeDtypeStruct((n_exits,), jnp.float32),
        grid_spec=pltpu.PrefetchScalarGridSpec(
            num_scalar_prefetch=0,
            grid=(num_tiles,),
            in_specs=[tile_spec] * (n_exits + 1),   # hr, then each sr
            out_specs=pl.BlockSpec(memory_space=pltpu.SMEM),
        ),
        compiler_params=pltpu.CompilerParams(
            dimension_semantics=("arbitrary",)),
        cost_estimate=pl.CostEstimate(
            flops=3 * n_exits * numel,
            transcendentals=0,
            bytes_accessed=(n_exits + 1) * numel * itemsize + n_exits * 4),
    )(hr2d, *sr2ds)

    means = sums / jnp.float32(numel)            # per-exit mean L1 loss
    total = jnp.sum(means)                       # total_loss = sum of exits
    return [total / jnp.float32(n_exits)] + [means[i] for i in range(n_exits)]


def _check(shape, n_exits=3, seed=0):
    key = jax.random.PRNGKey(seed)
    keys = jax.random.split(key, n_exits + 1)
    hr = jax.random.normal(keys[0], shape, dtype=jnp.float32)
    srs = [jax.random.normal(keys[i + 1], shape, dtype=jnp.float32)
           for i in range(n_exits)]

    losses = deep_supervision_l1(srs, hr)
    losses = [jax.block_until_ready(l) for l in losses]

    ref_exits = [jnp.mean(jnp.abs(sr - hr)) for sr in srs]
    ref_total = sum(ref_exits) / len(srs)
    ref = [ref_total] + ref_exits
    for got, want in zip(losses, ref):
        assert jnp.allclose(got, want, rtol=1e-5, atol=1e-5), (shape, got, want)


if __name__ == "__main__":
    # Primary small NCHW case (matches the module's image-like inputs).
    _check((2, 4, 16, 16), seed=0)
    # Odd sizes: exercises the in-kernel ragged-tail mask path.
    _check((2, 3, 33, 17), seed=1)
    # Larger case: exercises multi-tile accumulation across the row grid.
    _check((2, 8, 128, 128), seed=2)

    print("KERNEL_OK")
</pallas_src>

<mosaic_0001>
module attributes {stable_mosaic.version = 11 : i64} {
  func.func @kernel(%arg0: i32, %arg1: memref<16x128xf32, #tpu.memory_space<vmem>>, %arg2: memref<16x128xf32, #tpu.memory_space<vmem>>, %arg3: memref<16x128xf32, #tpu.memory_space<vmem>>, %arg4: memref<16x128xf32, #tpu.memory_space<vmem>>, %arg5: memref<3xf32, #tpu.memory_space<smem>>) attributes {dimension_semantics = [#tpu.dimension_semantics<arbitrary>], iteration_bounds = array<i64: 1>, scalar_prefetch = 0 : i64, scratch_operands = 0 : i64, tpu.core_type = #tpu.core_type<tc>, window_params = [{transform_indices = @transform_0, window_bounds = array<i64: 16, 128>}, {transform_indices = @transform_1, window_bounds = array<i64: 16, 128>}, {transform_indices = @transform_2, window_bounds = array<i64: 16, 128>}, {transform_indices = @transform_3, window_bounds = array<i64: 16, 128>}, {transform_indices = @transform_4, window_bounds = array<i64: 3>}]} {
    %c0_i32 = arith.constant 0 : i32
    %0 = arith.cmpi eq, %arg0, %c0_i32 : i32
    %1 = arith.extui %0 : i1 to i32
    %c0_i32_0 = arith.constant 0 : i32
    %2 = arith.cmpi ne, %1, %c0_i32_0 : i32
    scf.if %2 {
      %cst_14 = arith.constant 0.000000e+00 : f32
      %c0_15 = arith.constant 0 : index
      %34 = memref.load %arg5[%c0_15] : memref<3xf32, #tpu.memory_space<smem>>
      memref.store %cst_14, %arg5[%c0_15] : memref<3xf32, #tpu.memory_space<smem>>
      %cst_16 = arith.constant 0.000000e+00 : f32
      %c1_17 = arith.constant 1 : index
      %35 = memref.load %arg5[%c1_17] : memref<3xf32, #tpu.memory_space<smem>>
      memref.store %cst_16, %arg5[%c1_17] : memref<3xf32, #tpu.memory_space<smem>>
      %cst_18 = arith.constant 0.000000e+00 : f32
      %c2_19 = arith.constant 2 : index
      %36 = memref.load %arg5[%c2_19] : memref<3xf32, #tpu.memory_space<smem>>
      memref.store %cst_18, %arg5[%c2_19] : memref<3xf32, #tpu.memory_space<smem>>
    } else {
    }
    %c0 = arith.constant 0 : index
    %c0_1 = arith.constant 0 : index
    %3 = vector.load %arg1[%c0, %c0_1] : memref<16x128xf32, #tpu.memory_space<vmem>>, vector<16x128xf32>
    %c0_2 = arith.constant 0 : index
    %c0_3 = arith.constant 0 : index
    %4 = vector.load %arg2[%c0_2, %c0_3] : memref<16x128xf32, #tpu.memory_space<vmem>>, vector<16x128xf32>
    %5 = arith.subf %4, %3 : vector<16x128xf32>
    %6 = math.absf %5 : vector<16x128xf32>
    %c0_4 = arith.constant 0 : index
    %7 = memref.load %arg5[%c0_4] : memref<3xf32, #tpu.memory_space<smem>>
    %8 = vector.shape_cast %6 : vector<16x128xf32> to vector<1x16x128xf32>
    %cst = arith.constant dense<0.000000e+00> : vector<1xf32>
    %9 = vector.multi_reduction <add>, %8, %cst [1, 2] : vector<1x16x128xf32> to vector<1xf32>
    %10 = vector.shape_cast %9 : vector<1xf32> to vector<1x1x1xf32>
    %11 = vector.extract %10[0, 0, 0] : f32 from vector<1x1x1xf32>
    %12 = arith.addf %7, %11 : f32
    %c0_5 = arith.constant 0 : index
    %13 = memref.load %arg5[%c0_5] : memref<3xf32, #tpu.memory_space<smem>>
    memref.store %12, %arg5[%c0_5] : memref<3xf32, #tpu.memory_space<smem>>
    %c0_6 = arith.constant 0 : index
    %c0_7 = arith.constant 0 : index
    %14 = vector.load %arg3[%c0_6, %c0_7] : memref<16x128xf32, #tpu.memory_space<vmem>>, vector<16x128xf32>
    %15 = arith.subf %14, %3 : vector<16x128xf32>
    %16 = math.absf %15 : vector<16x128xf32>
    %c1 = arith.constant 1 : index
    %17 = memref.load %arg5[%c1] : memref<3xf32, #tpu.memory_space<smem>>
    %18 = vector.shape_cast %16 : vector<16x128xf32> to vector<1x16x128xf32>
    %cst_8 = arith.constant dense<0.000000e+00> : vector<1xf32>
    %19 = vector.multi_reduction <add>, %18, %cst_8 [1, 2] : vector<1x16x128xf32> to vector<1xf32>
    %20 = vector.shape_cast %19 : vector<1xf32> to vector<1x1x1xf32>
    %21 = vector.extract %20[0, 0, 0] : f32 from vector<1x1x1xf32>
    %22 = arith.addf %17, %21 : f32
    %c1_9 = arith.constant 1 : index
    %23 = memref.load %arg5[%c1_9] : memref<3xf32, #tpu.memory_space<smem>>
    memref.store %22, %arg5[%c1_9] : memref<3xf32, #tpu.memory_space<smem>>
    %c0_10 = arith.constant 0 : index
    %c0_11 = arith.constant 0 : index
    %24 = vector.load %arg4[%c0_10, %c0_11] : memref<16x128xf32, #tpu.memory_space<vmem>>, vector<16x128xf32>
    %25 = arith.subf %24, %3 : vector<16x128xf32>
    %26 = math.absf %25 : vector<16x128xf32>
    %c2 = arith.constant 2 : index
    %27 = memref.load %arg5[%c2] : memref<3xf32, #tpu.memory_space<smem>>
    %28 = vector.shape_cast %26 : vector<16x128xf32> to vector<1x16x128xf32>
    %cst_12 = arith.constant dense<0.000000e+00> : vector<1xf32>
    %29 = vector.multi_reduction <add>, %28, %cst_12 [1, 2] : vector<1x16x128xf32> to vector<1xf32>
    %30 = vector.shape_cast %29 : vector<1xf32> to vector<1x1x1xf32>
    %31 = vector.extract %30[0, 0, 0] : f32 from vector<1x1x1xf32>
    %32 = arith.addf %27, %31 : f32
    %c2_13 = arith.constant 2 : index
    %33 = memref.load %arg5[%c2_13] : memref<3xf32, #tpu.memory_space<smem>>
    memref.store %32, %arg5[%c2_13] : memref<3xf32, #tpu.memory_space<smem>>
    return
  }
  func.func @transform_0(%arg0: i32) -> (i32, i32) {
    %c0_i32 = arith.constant 0 : i32
    %c0_i32_0 = arith.constant 0 : i32
    return %arg0, %c0_i32 : i32, i32
  }
  func.func @transform_1(%arg0: i32) -> (i32, i32) {
    %c0_i32 = arith.constant 0 : i32
    %c0_i32_0 = arith.constant 0 : i32
    return %arg0, %c0_i32 : i32, i32
  }
  func.func @transform_2(%arg0: i32) -> (i32, i32) {
    %c0_i32 = arith.constant 0 : i32
    %c0_i32_0 = arith.constant 0 : i32
    return %arg0, %c0_i32 : i32, i32
  }
  func.func @transform_3(%arg0: i32) -> (i32, i32) {
    %c0_i32 = arith.constant 0 : i32
    %c0_i32_0 = arith.constant 0 : i32
    return %arg0, %c0_i32 : i32, i32
  }
  func.func @transform_4(%arg0: i32) -> i32 {
    %c0_i32 = arith.constant 0 : i32
    %c0_i32_0 = arith.constant 0 : i32
    return %c0_i32 : i32
  }
}

</mosaic_0001>

<llo_original>
// kernel: tpu_custom_call.1
$region0: #{tpu_custom_call.1}
  #allocation0 [shape = 'u32[]', space=smem, size = 0x4, offset = 0x4, fixed_abs, tag = 'smem constant byte address 0x4 - core index']
  #allocation1 [shape = 'u32[144,128]{1,0:T(1,128)}', space=vmem, size = 0x12000, scoped, tag = 'internal scratch']
  %s0 = inlined_call_operand.hbm [shape: f32[16,128], index: 0, kind: input, shape index: {}]
  %s1 = inlined_call_operand.hbm [shape: f32[16,128], index: 1, kind: input, shape index: {}]
  %s2 = inlined_call_operand.hbm [shape: f32[16,128], index: 2, kind: input, shape index: {}]
  %s3 = inlined_call_operand.hbm [shape: f32[16,128], index: 3, kind: input, shape index: {}]
  %s4 = inlined_call_operand.hbm [shape: f32[3], index: 4, kind: output, shape index: {}]
  %s5 = sld [smem:[#allocation0]]
  $region46: #{tpu_custom_call.1} parent=0
    _
  %s7 = ssub.s32 1, %s5
  %s8 = scalar_select 0, %s7, %s5
  $region1: #{tpu_custom_call.1} parent=0
    #allocation2 [shape = 'u8[8192]{0}', space=vmem, size = 0x2000, scoped, tag = 'input window, operand 0, single buffered']
    #allocation3 [shape = 's32[1]{0}', space=sflag, size = 0x4, scoped, tag = 'scoped memory for tpu_custom_call.1']
    #allocation4 [shape = 's32[1]{0}', space=sflag, size = 0x4, scoped, tag = 'scoped memory for tpu_custom_call.1']
    #allocation5 [shape = 'u8[8192]{0}', space=vmem, size = 0x2000, scoped, tag = 'input window, operand 1, single buffered']
    #allocation6 [shape = 's32[1]{0}', space=sflag, size = 0x4, scoped, tag = 'scoped memory for tpu_custom_call.1']
    #allocation7 [shape = 'u8[8192]{0}', space=vmem, size = 0x2000, scoped, tag = 'input window, operand 2, single buffered']
    #allocation8 [shape = 'u8[8192]{0}', space=vmem, size = 0x2000, scoped, tag = 'input window, operand 3, single buffered']
    #allocation9 [shape = 's32[1]{0}', space=sflag, size = 0x4, scoped, tag = 'scoped memory for tpu_custom_call.1']
    #allocation10 [shape = 'u8[512]{0}', space=smem, size = 0x200, scoped, tag = 'output window, operand 0, single buffered']
    %9 = vsyncpa [#allocation3], 0
    %10 = vsyncpa [#allocation6], 0
    %11 = vsyncpa [#allocation9], 0
    %12 = vsyncpa [#allocation4], 0
    // Predicated region
    $region2: #{tpu_custom_call.1} parent=1 // pred_check
      _
    $region3: #{tpu_custom_call.1} parent=1 // pred_check_branch
      %14 = sbr.rel (0) target = $region5
    $region4: #{tpu_custom_call.1} parent=1 // pred_region
      %s16 = ssub.s32 256, 256
      %17 = vsyncadd [#allocation3], %s16
      %s18 = sshll.u32 [#allocation2], 4
      %s19 = int_to_ptr.vmem [resolvable:$true] %s18
      %24 = dma.hbm_to_vmem [thread:$0]  %s0, 256, %s19, [#allocation3], 128, 128, 8
    $region5: #{tpu_custom_call.1} parent=1 // pred_fallthru
      _
    // Predicated region
    $region6: #{tpu_custom_call.1} parent=1 // pred_check
      _
    $region7: #{tpu_custom_call.1} parent=1 // pred_check_branch
      %26 = sbr.rel (0) target = $region9
    $region8: #{tpu_custom_call.1} parent=1 // pred_region
      %s28 = ssub.s32 256, 256
      %29 = vsyncadd [#allocation6], %s28
      %s30 = sshll.u32 [#allocation5], 4
      %s31 = int_to_ptr.vmem [resolvable:$true] %s30
      %36 = dma.hbm_to_vmem [thread:$0]  %s1, 256, %s31, [#allocation6], 128, 128, 8
    $region9: #{tpu_custom_call.1} parent=1 // pred_fallthru
      _
    // Predicated region
    $region10: #{tpu_custom_call.1} parent=1 // pred_check
      _
    $region11: #{tpu_custom_call.1} parent=1 // pred_check_branch
      %38 = sbr.rel (0) target = $region13
    $region12: #{tpu_custom_call.1} parent=1 // pred_region
      %s40 = ssub.s32 256, 256
      %41 = vsyncadd [#allocation6], %s40
      %s42 = sshll.u32 [#allocation7], 4
      %s43 = int_to_ptr.vmem [resolvable:$true] %s42
      %48 = dma.hbm_to_vmem [thread:$0]  %s2, 256, %s43, [#allocation6], 128, 128, 8
    $region13: #{tpu_custom_call.1} parent=1 // pred_fallthru
      _
    // Predicated region
    $region14: #{tpu_custom_call.1} parent=1 // pred_check
      _
    $region15: #{tpu_custom_call.1} parent=1 // pred_check_branch
      %50 = sbr.rel (0) target = $region17
    $region16: #{tpu_custom_call.1} parent=1 // pred_region
      %s52 = ssub.s32 256, 256
      %53 = vsyncadd [#allocation9], %s52
      %s54 = sshll.u32 [#allocation8], 4
      %s55 = int_to_ptr.vmem [resolvable:$true] %s54
      %60 = dma.hbm_to_vmem [thread:$0]  %s3, 256, %s55, [#allocation9], 128, 128, 8
    $region17: #{tpu_custom_call.1} parent=1 // pred_fallthru
      _
    // Predicated region
    $region18: #{tpu_custom_call.1} parent=1 // pred_check
      _
    $region19: #{tpu_custom_call.1} parent=1 // pred_check_branch
      %62 = sbr.rel (0) target = $region21
    $region20: #{tpu_custom_call.1} parent=1 // pred_region
      %63 = dma.done [#allocation3], 256
    $region21: #{tpu_custom_call.1} parent=1 // pred_fallthru
      _
    // Predicated region
    $region22: #{tpu_custom_call.1} parent=1 // pred_check
      _
    $region23: #{tpu_custom_call.1} parent=1 // pred_check_branch
      %65 = sbr.rel (0) target = $region25
    $region24: #{tpu_custom_call.1} parent=1 // pred_region
      %66 = dma.done [#allocation6], 256
    $region25: #{tpu_custom_call.1} parent=1 // pred_fallthru
      _
    // Predicated region
    $region26: #{tpu_custom_call.1} parent=1 // pred_check
      _
    $region27: #{tpu_custom_call.1} parent=1 // pred_check_branch
      %68 = sbr.rel (0) target = $region29
    $region28: #{tpu_custom_call.1} parent=1 // pred_region
      %69 = dma.done [#allocation6], 256
    $region29: #{tpu_custom_call.1} parent=1 // pred_fallthru
      _
    // Predicated region
    $region30: #{tpu_custom_call.1} parent=1 // pred_check
      _
    $region31: #{tpu_custom_call.1} parent=1 // pred_check_branch
      %71 = sbr.rel (0) target = $region33
    $region32: #{tpu_custom_call.1} parent=1 // pred_region
      %72 = dma.done [#allocation9], 256
    $region33: #{tpu_custom_call.1} parent=1 // pred_fallthru
      _
    %p73 = scmp.eq.s32.totalorder 0, 0
    // Predicated region
    $region34: #{tpu_custom_call.1} parent=1 // pred_check
      %p74 = pneg %p73
    $region35: #{tpu_custom_call.1} parent=1 // pred_check_branch
      %76 = sbr.rel (%p74) target = $region37
    $region36: #{tpu_custom_call.1} parent=1 // pred_region
      %s77 = scalar_lea.smem [#allocation10], 0
      %78 = sst [smem:[%s77]] 0.0
      %s79 = scalar_lea.smem [#allocation10], 1
      %80 = sst [smem:[%s79]] 0.0
      %s81 = scalar_lea.smem [#allocation10], 2
      %82 = sst [smem:[%s81]] 0.0
    $region37: #{tpu_custom_call.1} parent=1 // pred_fallthru
      _
    %v83 = vld [vmem:[#allocation2] sm:$0xff]
    %v84 = vld [vmem:[#allocation2 + $0x8] sm:$0xff]
    %v85 = vld [vmem:[#allocation5] sm:$0xff]
    %v86 = vld [vmem:[#allocation5 + $0x8] sm:$0xff]
    %v87 = vsub.f32 %v85, %v83
    %v88 = vsub.f32 %v86, %v84
    %v89 = vand.u32 2147483647, %v87
    %v90 = vand.u32 2147483647, %v88
    %s91 = sld [smem:[#allocation10]]
    %v92 = vadd.f32 %v89, %v90
    %93 = vadd.xlane.f32.xlu0 %v92
    %v94 = vpop.xlane.xlu0 %93
    %v95 = vrot.slane %v94, 4
    %v96 = vadd.f32 %v94, %v95
    %v97 = vrot.slane %v96, 2
    %v98 = vadd.f32 %v96, %v97
    %v99 = vrot.slane %v98, 1
    %v100 = vadd.f32 %v98, %v99
    %s101 = vtos %v100
    %s102 = sadd.f32 %s91, %s101
    %s103 = scalar_lea.smem [#allocation10], 0
    %104 = sst [smem:[%s103]] %s102
    %v105 = vld [vmem:[#allocation7] sm:$0xff]
    %v106 = vld [vmem:[#allocation7 + $0x8] sm:$0xff]
    %v107 = vsub.f32 %v105, %v83
    %v108 = vsub.f32 %v106, %v84
    %v109 = vand.u32 2147483647, %v107
    %v110 = vand.u32 2147483647, %v108
    %s111 = sld [smem:[#allocation10 + $0x1]]
    %v112 = vadd.f32 %v109, %v110
    %113 = vadd.xlane.f32.xlu0 %v112
    %v114 = vpop.xlane.xlu0 %113
    %v115 = vrot.slane %v114, 4
    %v116 = vadd.f32 %v114, %v115
    %v117 = vrot.slane %v116, 2
    %v118 = vadd.f32 %v116, %v117
    %v119 = vrot.slane %v118, 1
    %v120 = vadd.f32 %v118, %v119
    %s121 = vtos %v120
    %s122 = sadd.f32 %s111, %s121
    %s123 = scalar_lea.smem [#allocation10], 1
    %124 = sst [smem:[%s123]] %s122
    %v125 = vld [vmem:[#allocation8] sm:$0xff]
    %v126 = vld [vmem:[#allocation8 + $0x8] sm:$0xff]
    %v127 = vsub.f32 %v125, %v83
    %v128 = vsub.f32 %v126, %v84
    %v129 = vand.u32 2147483647, %v127
    %v130 = vand.u32 2147483647, %v128
    %s131 = sld [smem:[#allocation10 + $0x2]]
    %v132 = vadd.f32 %v129, %v130
    %133 = vadd.xlane.f32.xlu0 %v132
    %v134 = vpop.xlane.xlu0 %133
    %v135 = vrot.slane %v134, 4
    %v136 = vadd.f32 %v134, %v135
    %v137 = vrot.slane %v136, 2
    %v138 = vadd.f32 %v136, %v137
    %v139 = vrot.slane %v138, 1
    %v140 = vadd.f32 %v138, %v139
    %s141 = vtos %v140
    %s142 = sadd.f32 %s131, %s141
    %s143 = scalar_lea.smem [#allocation10], 2
    %144 = sst [smem:[%s143]] %s142
    // Predicated region
    $region38: #{tpu_custom_call.1} parent=1 // pred_check
      _
    $region39: #{tpu_custom_call.1} parent=1 // pred_check_branch
      %146 = sbr.rel (0) target = $region41
    $region40: #{tpu_custom_call.1} parent=1 // pred_region
      %s148 = ssub.s32 16, 16
      %149 = vsyncadd [#allocation4], %s148
      %152 = dma.smem_to_hbm [#allocation10], 16, %s4, [#allocation4]
    $region41: #{tpu_custom_call.1} parent=1 // pred_fallthru
      _
    // Predicated region
    $region42: #{tpu_custom_call.1} parent=1 // pred_check
      _
    $region43: #{tpu_custom_call.1} parent=1 // pred_check_branch
      %154 = sbr.rel (0) target = $region45
    $region44: #{tpu_custom_call.1} parent=1 // pred_region
      %155 = dma.done [#allocation4], 16
    $region45: #{tpu_custom_call.1} parent=1 // pred_fallthru
      _
    %156 = sfence
    %157 = vsyncpa [#allocation3], 1
    %158 = vsyncpa [#allocation6], 1
    %159 = vsyncpa [#allocation9], 1
    %160 = vsyncpa [#allocation4], 1

</llo_original>
